<compile_context>
chip_gen: v7x
topology: tpu7x:2x2x1
jax: 0.10.0
libtpu: 0.0.40
codegen_flags: <defaults>
</compile_context>

<pallas_src>
import jax
import jax.numpy as jnp
import numpy as np
from jax.experimental import pallas as pl
from jax.experimental.pallas import tpu as pltpu


def _autoencoder_kernel(x_ref, we_ref, be_ref, wd_ref, bd_ref, o_ref):
    """Fused encode->decode for one batch tile.

    o = ((x @ W_e + b_e) @ W_d + b_d)
    bf16 MXU operands, f32 accumulation, f32 bias adds.
    """
    x = x_ref[...].astype(jnp.bfloat16)                      # (TN, D)
    h = jnp.dot(x, we_ref[...],
                preferred_element_type=jnp.float32)          # (TN, HID)  MXU
    h = h + be_ref[...]                                      # f32 bias
    y = jnp.dot(h.astype(jnp.bfloat16), wd_ref[...],
                preferred_element_type=jnp.float32)          # (TN, D)    MXU
    y = y + bd_ref[...]                                      # f32 bias
    o_ref[...] = y.astype(o_ref.dtype)


def autoencoder_forward(x_nchw, w_enc, b_enc, w_dec, b_dec, *, tile_n=256):
    """x_nchw: (N, C, H, W).  Returns decoded tensor with the same shape.

    Weights are cast to bf16 for storage/HBM traffic; math accumulates in f32.
    """
    n = x_nchw.shape[0]
    io_shape = x_nchw.shape[1:]
    d = int(np.prod(io_shape))
    hid = w_enc.shape[1]

    # Lane-dense feature dim: pad D up to a multiple of 128 so tiles stay
    # aligned to the (8, 128) vreg layout and stores are unmasked.
    d_pad = max(128, ((d + 127) // 128) * 128)

    io_dtype = x_nchw.dtype
    x2d = x_nchw.reshape(n, d)
    w_enc_bf = w_enc.astype(jnp.bfloat16)
    w_dec_bf = w_dec.astype(jnp.bfloat16)
    b_enc2d = b_enc.reshape(1, hid).astype(jnp.float32)
    b_dec2d = b_dec.reshape(1, d).astype(jnp.float32)

    if d_pad != d:
        pad = d_pad - d
        x2d = jnp.pad(x2d, ((0, 0), (0, pad)))
        w_enc_bf = jnp.pad(w_enc_bf, ((0, pad), (0, 0)))   # zero rows: no effect
        w_dec_bf = jnp.pad(w_dec_bf, ((0, 0), (0, pad)))   # extra cols sliced off
        b_dec2d = jnp.pad(b_dec2d, ((0, 0), (0, pad)))

    # Batch tiling: pipelined x/out tiles, weights resident across all steps.
    tn = n if n <= tile_n else tile_n
    grid = (pl.cdiv(n, tn),)

    # Advisory cost estimate (two GEMMs + bias adds).
    io_itemsize = jnp.dtype(io_dtype).itemsize
    flops = 4 * n * d_pad * hid
    bytes_accessed = int(
        n * d_pad * io_itemsize            # x in
        + n * d_pad * io_itemsize          # out
        + w_enc_bf.size * 2 + w_dec_bf.size * 2
        + b_enc2d.size * 4 + b_dec2d.size * 4)

    # Scoped-VMEM budget: resident (double-buffered) weights + pipelined
    # x/out tiles + f32 intermediates, with headroom.  Capped below v7x's
    # 64 MiB physical VMEM; floored at the common 32 MiB default.
    weight_vmem = 2 * (w_enc_bf.size * 2 + w_dec_bf.size * 2) \
        + b_enc2d.size * 4 + b_dec2d.size * 4
    io_vmem = 2 * 2 * tn * d_pad * io_itemsize
    scratch_vmem = tn * d_pad * 4 + tn * hid * 4
    vmem_limit = int(min(64 * 1024 * 1024,
                         max(32 * 1024 * 1024,
                             1.5 * (weight_vmem + io_vmem + scratch_vmem))))

    out2d = pl.pallas_call(
        _autoencoder_kernel,
        out_shape=jax.ShapeDtypeStruct((n, d_pad), io_dtype),
        grid=grid,
        in_specs=[
            pl.BlockSpec((tn, d_pad), lambda i: (i, 0)),    # x tile (pipelined)
            pl.BlockSpec((d_pad, hid), lambda i: (0, 0)),   # W_enc (resident)
            pl.BlockSpec((1, hid), lambda i: (0, 0)),       # b_enc (resident)
            pl.BlockSpec((hid, d_pad), lambda i: (0, 0)),   # W_dec (resident)
            pl.BlockSpec((1, d_pad), lambda i: (0, 0)),     # b_dec (resident)
        ],
        out_specs=pl.BlockSpec((tn, d_pad), lambda i: (i, 0)),
        compiler_params=pltpu.CompilerParams(
            dimension_semantics=("parallel",),   # megacore split on v7x
            vmem_limit_bytes=vmem_limit),
        cost_estimate=pl.CostEstimate(
            flops=flops, transcendentals=0, bytes_accessed=bytes_accessed),
    )(x2d, w_enc_bf, b_enc2d, w_dec_bf, b_dec2d)

    if d_pad != d:
        out2d = out2d[:, :d]
    return out2d.reshape((n,) + io_shape)


def init_params(input_output_shape, hidden, key):
    """Deterministic nn.Linear-style init (uniform +/- 1/sqrt(fan_in))."""
    d = int(np.prod(input_output_shape))
    k1, k2, k3, k4 = jax.random.split(key, 4)
    lim_e = 1.0 / np.sqrt(d)
    lim_d = 1.0 / np.sqrt(hidden)
    w_enc = jax.random.uniform(k1, (d, hidden), jnp.float32, -lim_e, lim_e)
    b_enc = jax.random.uniform(k2, (hidden,), jnp.float32, -lim_e, lim_e)
    w_dec = jax.random.uniform(k3, (hidden, d), jnp.float32, -lim_d, lim_d)
    b_dec = jax.random.uniform(k4, (d,), jnp.float32, -lim_d, lim_d)
    return w_enc, b_enc, w_dec, b_dec


if __name__ == "__main__":
    key = jax.random.PRNGKey(0)
    kx, kp = jax.random.split(key)

    batch = 2
    input_output_shape = (4, 16, 16)   # C, H, W  -> D = 1024 (lane-dense)
    hidden = 32                        # HID=32 -> DMA-roofline bound, by design

    x = jax.random.normal(kx, (batch,) + input_output_shape, jnp.float32)
    w_enc, b_enc, w_dec, b_dec = init_params(input_output_shape, hidden, kp)

    out = autoencoder_forward(x, w_enc, b_enc, w_dec, b_dec)
    out = jax.block_until_ready(out)

    # Reference mirroring the kernel's bf16-operand / f32-accumulate math
    # (kernel stores weights in bf16, so compare against a matching reference).
    x2d = x.reshape(batch, -1)
    we_bf = w_enc.astype(jnp.bfloat16)
    wd_bf = w_dec.astype(jnp.bfloat16)
    h_ref = jnp.dot(x2d.astype(jnp.bfloat16), we_bf,
                    preferred_element_type=jnp.float32) + b_enc
    y_ref = jnp.dot(h_ref.astype(jnp.bfloat16), wd_bf,
                    preferred_element_type=jnp.float32) + b_dec
    ref = y_ref.reshape(x.shape)
    np.testing.assert_allclose(np.asarray(out), np.asarray(ref),
                               rtol=5e-3, atol=5e-3)

    assert out.shape == x.shape and out.dtype == x.dtype
    print("KERNEL_OK")
</pallas_src>

<mosaic_0001>
module attributes {stable_mosaic.version = 11 : i64} {
  func.func @_autoencoder_kernel(%arg0: i32, %arg1: memref<2x1024xf32, #tpu.memory_space<vmem>>, %arg2: memref<1024x32xbf16, #tpu.memory_space<vmem>>, %arg3: memref<1x32xf32, #tpu.memory_space<vmem>>, %arg4: memref<32x1024xbf16, #tpu.memory_space<vmem>>, %arg5: memref<1x1024xf32, #tpu.memory_space<vmem>>, %arg6: memref<2x1024xf32, #tpu.memory_space<vmem>>) attributes {dimension_semantics = [#tpu.dimension_semantics<parallel>], iteration_bounds = array<i64: 1>, scalar_prefetch = 0 : i64, scratch_operands = 0 : i64, tpu.core_type = #tpu.core_type<tc>, window_params = [{transform_indices = @transform_0, window_bounds = array<i64: 2, 1024>}, {pipeline_mode = #tpu.pipeline_mode<synchronous>, transform_indices = @transform_1, window_bounds = array<i64: 1024, 32>}, {pipeline_mode = #tpu.pipeline_mode<synchronous>, transform_indices = @transform_2, window_bounds = array<i64: 1, 32>}, {pipeline_mode = #tpu.pipeline_mode<synchronous>, transform_indices = @transform_3, window_bounds = array<i64: 32, 1024>}, {pipeline_mode = #tpu.pipeline_mode<synchronous>, transform_indices = @transform_4, window_bounds = array<i64: 1, 1024>}, {transform_indices = @transform_5, window_bounds = array<i64: 2, 1024>}]} {
    %c0 = arith.constant 0 : index
    %c0_0 = arith.constant 0 : index
    %0 = vector.load %arg1[%c0, %c0_0] : memref<2x1024xf32, #tpu.memory_space<vmem>>, vector<2x1024xf32>
    %1 = arith.truncf %0 : vector<2x1024xf32> to vector<2x1024xbf16>
    %c0_1 = arith.constant 0 : index
    %c0_2 = arith.constant 0 : index
    %2 = vector.load %arg2[%c0_1, %c0_2] : memref<1024x32xbf16, #tpu.memory_space<vmem>>, vector<1024x32xbf16>
    %cst = arith.constant dense<0.000000e+00> : vector<2x32xf32>
    %3 = tpu.matmul %1, %2, %cst {dimension_numbers = #tpu.dot_dimension_numbers<[1], [0], [0], [1], [0, 0, 1, 1], [], []>} : vector<2x1024xbf16>, vector<1024x32xbf16>, vector<2x32xf32> -> vector<2x32xf32>
    %c0_3 = arith.constant 0 : index
    %c0_4 = arith.constant 0 : index
    %4 = vector.load %arg3[%c0_3, %c0_4] : memref<1x32xf32, #tpu.memory_space<vmem>>, vector<1x32xf32>
    %5 = vector.broadcast %4 : vector<1x32xf32> to vector<2x32xf32>
    %6 = arith.addf %3, %5 : vector<2x32xf32>
    %7 = arith.truncf %6 : vector<2x32xf32> to vector<2x32xbf16>
    %c0_5 = arith.constant 0 : index
    %c0_6 = arith.constant 0 : index
    %8 = vector.load %arg4[%c0_5, %c0_6] : memref<32x1024xbf16, #tpu.memory_space<vmem>>, vector<32x1024xbf16>
    %cst_7 = arith.constant dense<0.000000e+00> : vector<2x1024xf32>
    %9 = tpu.matmul %7, %8, %cst_7 {dimension_numbers = #tpu.dot_dimension_numbers<[1], [0], [0], [1], [0, 0, 1, 1], [], []>} : vector<2x32xbf16>, vector<32x1024xbf16>, vector<2x1024xf32> -> vector<2x1024xf32>
    %c0_8 = arith.constant 0 : index
    %c0_9 = arith.constant 0 : index
    %10 = vector.load %arg5[%c0_8, %c0_9] : memref<1x1024xf32, #tpu.memory_space<vmem>>, vector<1x1024xf32>
    %11 = vector.broadcast %10 : vector<1x1024xf32> to vector<2x1024xf32>
    %12 = arith.addf %9, %11 : vector<2x1024xf32>
    %c0_10 = arith.constant 0 : index
    %c0_11 = arith.constant 0 : index
    %13 = vector.load %arg6[%c0_10, %c0_11] : memref<2x1024xf32, #tpu.memory_space<vmem>>, vector<2x1024xf32>
    tpu.vector_store %arg6[%c0_10, %c0_11], %12 {strides = array<i32>} : memref<2x1024xf32, #tpu.memory_space<vmem>>, vector<2x1024xf32>,
    return
  }
  func.func @transform_0(%arg0: i32) -> (i32, i32) {
    %c0_i32 = arith.constant 0 : i32
    %c0_i32_0 = arith.constant 0 : i32
    return %arg0, %c0_i32 : i32, i32
  }
  func.func @transform_1(%arg0: i32) -> (i32, i32) {
    %c0_i32 = arith.constant 0 : i32
    %c0_i32_0 = arith.constant 0 : i32
    %c0_i32_1 = arith.constant 0 : i32
    return %c0_i32, %c0_i32_0 : i32, i32
  }
  func.func @transform_2(%arg0: i32) -> (i32, i32) {
    %c0_i32 = arith.constant 0 : i32
    %c0_i32_0 = arith.constant 0 : i32
    %c0_i32_1 = arith.constant 0 : i32
    return %c0_i32, %c0_i32_0 : i32, i32
  }
  func.func @transform_3(%arg0: i32) -> (i32, i32) {
    %c0_i32 = arith.constant 0 : i32
    %c0_i32_0 = arith.constant 0 : i32
    %c0_i32_1 = arith.constant 0 : i32
    return %c0_i32, %c0_i32_0 : i32, i32
  }
  func.func @transform_4(%arg0: i32) -> (i32, i32) {
    %c0_i32 = arith.constant 0 : i32
    %c0_i32_0 = arith.constant 0 : i32
    %c0_i32_1 = arith.constant 0 : i32
    return %c0_i32, %c0_i32_0 : i32, i32
  }
  func.func @transform_5(%arg0: i32) -> (i32, i32) {
    %c0_i32 = arith.constant 0 : i32
    %c0_i32_0 = arith.constant 0 : i32
    return %arg0, %c0_i32 : i32, i32
  }
}

</mosaic_0001>

<llo_original>
// kernel: tpu_custom_call.1
$region0: #{tpu_custom_call.1}
  #allocation0 [shape = 'u32[]', space=smem, size = 0x4, offset = 0x4, fixed_abs, tag = 'smem constant byte address 0x4 - core index']
  #allocation1 [shape = 'u32[144,128]{1,0:T(1,128)}', space=vmem, size = 0x12000, scoped, tag = 'internal scratch']
  %s0 = inlined_call_operand.vmem [shape: f32[2,1024], index: 0, kind: input, shape index: {}]
  %s1 = inlined_call_operand.vmem [shape: bf16[1024,32], index: 1, kind: input, shape index: {}]
  %s2 = inlined_call_operand.vmem [shape: f32[1,32], index: 2, kind: input, shape index: {}]
  %s3 = inlined_call_operand.vmem [shape: bf16[32,1024], index: 3, kind: input, shape index: {}]
  %s4 = inlined_call_operand.vmem [shape: f32[1,1024], index: 4, kind: input, shape index: {}]
  %s5 = inlined_call_operand.hbm [shape: f32[2,1024], index: 5, kind: output, shape index: {}]
  %s6 = sld [smem:[#allocation0]]
  $region30: #{tpu_custom_call.1} parent=0
    _
  %s8 = ssub.s32 1, %s6
  %s9 = scalar_select 0, %s8, %s6
  $region1: #{tpu_custom_call.1} parent=0
    #allocation2 [shape = 'u8[8192]{0}', space=vmem, size = 0x2000, scoped, tag = 'output window, operand 0, single buffered']
    #allocation3 [shape = 's32[1]{0}', space=sflag, size = 0x4, scoped, tag = 'scoped memory for tpu_custom_call.1']
    %10 = vsyncpa [#allocation3], 0
    // Predicated region
    $region2: #{tpu_custom_call.1} parent=1 // pred_check
      _
    $region3: #{tpu_custom_call.1} parent=1 // pred_check_branch
      %12 = sbr.rel (0) target = $region5
    $region4: #{tpu_custom_call.1} parent=1 // pred_region
      _
    $region5: #{tpu_custom_call.1} parent=1 // pred_fallthru
      _
    // Predicated region
    $region6: #{tpu_custom_call.1} parent=1 // pred_check
      _
    $region7: #{tpu_custom_call.1} parent=1 // pred_check_branch
      %14 = sbr.rel (0) target = $region9
    $region8: #{tpu_custom_call.1} parent=1 // pred_region
      _
    $region9: #{tpu_custom_call.1} parent=1 // pred_fallthru
      _
    // Predicated region
    $region10: #{tpu_custom_call.1} parent=1 // pred_check
      _
    $region11: #{tpu_custom_call.1} parent=1 // pred_check_branch
      %16 = sbr.rel (0) target = $region13
    $region12: #{tpu_custom_call.1} parent=1 // pred_region
      _
    $region13: #{tpu_custom_call.1} parent=1 // pred_fallthru
      _
    // Predicated region
    $region14: #{tpu_custom_call.1} parent=1 // pred_check
      _
    $region15: #{tpu_custom_call.1} parent=1 // pred_check_branch
      %18 = sbr.rel (0) target = $region17
    $region16: #{tpu_custom_call.1} parent=1 // pred_region
      _
    $region17: #{tpu_custom_call.1} parent=1 // pred_fallthru
      _
    // Predicated region
    $region18: #{tpu_custom_call.1} parent=1 // pred_check
      _
    $region19: #{tpu_custom_call.1} parent=1 // pred_check_branch
      %20 = sbr.rel (0) target = $region21
    $region20: #{tpu_custom_call.1} parent=1 // pred_region
      _
    $region21: #{tpu_custom_call.1} parent=1 // pred_fallthru
      _
    %v22 = vld [vmem:[%s0] sm:$0xff]
    %v23 = vld [vmem:[%s0 + $0x8] sm:$0xff]
    %v26 = vcombine.high %v22, %v22
    %v28 = vunpack.c.l.s4 1983009808
    %v29 = vunpack.c.0.s8 %v28
    %v30 = vlaneseq
    %v31 = vshrl.u32 %v30, 7
    %v32 = vsub.s32 %v29, %v31
    %v33 = vrot.slane %v22, %v32
    %v35 = vunpack.c.l.s4 1983009808
    %v36 = vunpack.c.0.s8 %v35
    %v37 = vlaneseq
    %v38 = vshrl.u32 %v37, 7
    %v39 = vsub.s32 %v36, %v38
    %v40 = vrot.slane %v26, %v39
    %v41 = vcombine.high %v33, %v33
    %v42 = vcombine.high %v40, %v40
    %v43 = vcombine.high %v23, %v23
    %v45 = vunpack.c.l.s4 1983009808
    %v46 = vunpack.c.0.s8 %v45
    %v47 = vlaneseq
    %v48 = vshrl.u32 %v47, 7
    %v49 = vsub.s32 %v46, %v48
    %v50 = vrot.slane %v23, %v49
    %v52 = vunpack.c.l.s4 1983009808
    %v53 = vunpack.c.0.s8 %v52
    %v54 = vlaneseq
    %v55 = vshrl.u32 %v54, 7
    %v56 = vsub.s32 %v53, %v55
    %v57 = vrot.slane %v43, %v56
    %v58 = vcombine.high %v50, %v50
    %v59 = vcombine.high %v57, %v57
    %v68 = vpack.c.bf16 %v33, %v33
    %v69 = vpack.c.bf16 %v41, %v41
    %v70 = vpack.c.bf16 %v40, %v40
    %v71 = vpack.c.bf16 %v42, %v42
    %v72 = vpack.c.bf16 %v50, %v50
    %v73 = vpack.c.bf16 %v58, %v58
    %v74 = vpack.c.bf16 %v57, %v57
    %v75 = vpack.c.bf16 %v59, %v59
    %v76 = vld [vmem:[%s1] sm:$0xf]
    %v77 = vld [vmem:[%s1 + $0x4] sm:$0xf]
    %v78 = vld [vmem:[%s1 + $0x8] sm:$0xf]
    %v79 = vld [vmem:[%s1 + $0xc] sm:$0xf]
    %v80 = vld [vmem:[%s1 + $0x10] sm:$0xf]
    %v81 = vld [vmem:[%s1 + $0x14] sm:$0xf]
    %v82 = vld [vmem:[%s1 + $0x18] sm:$0xf]
    %v83 = vld [vmem:[%s1 + $0x1c] sm:$0xf]
    %v84 = vld [vmem:[%s1 + $0x20] sm:$0xf]
    %v85 = vld [vmem:[%s1 + $0x24] sm:$0xf]
    %v86 = vld [vmem:[%s1 + $0x28] sm:$0xf]
    %v87 = vld [vmem:[%s1 + $0x2c] sm:$0xf]
    %v88 = vld [vmem:[%s1 + $0x30] sm:$0xf]
    %v89 = vld [vmem:[%s1 + $0x34] sm:$0xf]
    %v90 = vld [vmem:[%s1 + $0x38] sm:$0xf]
    %v91 = vld [vmem:[%s1 + $0x3c] sm:$0xf]
    %v92 = vld [vmem:[%s1 + $0x40] sm:$0xf]
    %v93 = vld [vmem:[%s1 + $0x44] sm:$0xf]
    %v94 = vld [vmem:[%s1 + $0x48] sm:$0xf]
    %v95 = vld [vmem:[%s1 + $0x4c] sm:$0xf]
    %v96 = vld [vmem:[%s1 + $0x50] sm:$0xf]
    %v97 = vld [vmem:[%s1 + $0x54] sm:$0xf]
    %v98 = vld [vmem:[%s1 + $0x58] sm:$0xf]
    %v99 = vld [vmem:[%s1 + $0x5c] sm:$0xf]
    %v100 = vld [vmem:[%s1 + $0x60] sm:$0xf]
    %v101 = vld [vmem:[%s1 + $0x64] sm:$0xf]
    %v102 = vld [vmem:[%s1 + $0x68] sm:$0xf]
    %v103 = vld [vmem:[%s1 + $0x6c] sm:$0xf]
    %v104 = vld [vmem:[%s1 + $0x70] sm:$0xf]
    %v105 = vld [vmem:[%s1 + $0x74] sm:$0xf]
    %v106 = vld [vmem:[%s1 + $0x78] sm:$0xf]
    %v107 = vld [vmem:[%s1 + $0x7c] sm:$0xf]
    %v108 = vld [vmem:[%s1 + $0x80] sm:$0xf]
    %v109 = vld [vmem:[%s1 + $0x84] sm:$0xf]
    %v110 = vld [vmem:[%s1 + $0x88] sm:$0xf]
    %v111 = vld [vmem:[%s1 + $0x8c] sm:$0xf]
    %v112 = vld [vmem:[%s1 + $0x90] sm:$0xf]
    %v113 = vld [vmem:[%s1 + $0x94] sm:$0xf]
    %v114 = vld [vmem:[%s1 + $0x98] sm:$0xf]
    %v115 = vld [vmem:[%s1 + $0x9c] sm:$0xf]
    %v116 = vld [vmem:[%s1 + $0xa0] sm:$0xf]
    %v117 = vld [vmem:[%s1 + $0xa4] sm:$0xf]
    %v118 = vld [vmem:[%s1 + $0xa8] sm:$0xf]
    %v119 = vld [vmem:[%s1 + $0xac] sm:$0xf]
    %v120 = vld [vmem:[%s1 + $0xb0] sm:$0xf]
    %v121 = vld [vmem:[%s1 + $0xb4] sm:$0xf]
    %v122 = vld [vmem:[%s1 + $0xb8] sm:$0xf]
    %v123 = vld [vmem:[%s1 + $0xbc] sm:$0xf]
    %v124 = vld [vmem:[%s1 + $0xc0] sm:$0xf]
    %v125 = vld [vmem:[%s1 + $0xc4] sm:$0xf]
    %v126 = vld [vmem:[%s1 + $0xc8] sm:$0xf]
    %v127 = vld [vmem:[%s1 + $0xcc] sm:$0xf]
    %v128 = vld [vmem:[%s1 + $0xd0] sm:$0xf]
    %v129 = vld [vmem:[%s1 + $0xd4] sm:$0xf]
    %v130 = vld [vmem:[%s1 + $0xd8] sm:$0xf]
    %v131 = vld [vmem:[%s1 + $0xdc] sm:$0xf]
    %v132 = vld [vmem:[%s1 + $0xe0] sm:$0xf]
    %v133 = vld [vmem:[%s1 + $0xe4] sm:$0xf]
    %v134 = vld [vmem:[%s1 + $0xe8] sm:$0xf]
    %v135 = vld [vmem:[%s1 + $0xec] sm:$0xf]
    %v136 = vld [vmem:[%s1 + $0xf0] sm:$0xf]
    %v137 = vld [vmem:[%s1 + $0xf4] sm:$0xf]
    %v138 = vld [vmem:[%s1 + $0xf8] sm:$0xf]
    %v139 = vld [vmem:[%s1 + $0xfc] sm:$0xf]
    %v140 = vld [vmem:[%s1 + $0x100] sm:$0xf]
    %v141 = vld [vmem:[%s1 + $0x104] sm:$0xf]
    %v142 = vld [vmem:[%s1 + $0x108] sm:$0xf]
    %v143 = vld [vmem:[%s1 + $0x10c] sm:$0xf]
    %v144 = vld [vmem:[%s1 + $0x110] sm:$0xf]
    %v145 = vld [vmem:[%s1 + $0x114] sm:$0xf]
    %v146 = vld [vmem:[%s1 + $0x118] sm:$0xf]
    %v147 = vld [vmem:[%s1 + $0x11c] sm:$0xf]
    %v148 = vld [vmem:[%s1 + $0x120] sm:$0xf]
    %v149 = vld [vmem:[%s1 + $0x124] sm:$0xf]
    %v150 = vld [vmem:[%s1 + $0x128] sm:$0xf]
    %v151 = vld [vmem:[%s1 + $0x12c] sm:$0xf]
    %v152 = vld [vmem:[%s1 + $0x130] sm:$0xf]
    %v153 = vld [vmem:[%s1 + $0x134] sm:$0xf]
    %v154 = vld [vmem:[%s1 + $0x138] sm:$0xf]
    %v155 = vld [vmem:[%s1 + $0x13c] sm:$0xf]
    %v156 = vld [vmem:[%s1 + $0x140] sm:$0xf]
    %v157 = vld [vmem:[%s1 + $0x144] sm:$0xf]
    %v158 = vld [vmem:[%s1 + $0x148] sm:$0xf]
    %v159 = vld [vmem:[%s1 + $0x14c] sm:$0xf]
    %v160 = vld [vmem:[%s1 + $0x150] sm:$0xf]
    %v161 = vld [vmem:[%s1 + $0x154] sm:$0xf]
    %v162 = vld [vmem:[%s1 + $0x158] sm:$0xf]
    %v163 = vld [vmem:[%s1 + $0x15c] sm:$0xf]
    %v164 = vld [vmem:[%s1 + $0x160] sm:$0xf]
    %v165 = vld [vmem:[%s1 + $0x164] sm:$0xf]
    %v166 = vld [vmem:[%s1 + $0x168] sm:$0xf]
    %v167 = vld [vmem:[%s1 + $0x16c] sm:$0xf]
    %v168 = vld [vmem:[%s1 + $0x170] sm:$0xf]
    %v169 = vld [vmem:[%s1 + $0x174] sm:$0xf]
    %v170 = vld [vmem:[%s1 + $0x178] sm:$0xf]
    %v171 = vld [vmem:[%s1 + $0x17c] sm:$0xf]
    %v172 = vld [vmem:[%s1 + $0x180] sm:$0xf]
    %v173 = vld [vmem:[%s1 + $0x184] sm:$0xf]
    %v174 = vld [vmem:[%s1 + $0x188] sm:$0xf]
    %v175 = vld [vmem:[%s1 + $0x18c] sm:$0xf]
    %v176 = vld [vmem:[%s1 + $0x190] sm:$0xf]
    %v177 = vld [vmem:[%s1 + $0x194] sm:$0xf]
    %v178 = vld [vmem:[%s1 + $0x198] sm:$0xf]
    %v179 = vld [vmem:[%s1 + $0x19c] sm:$0xf]
    %v180 = vld [vmem:[%s1 + $0x1a0] sm:$0xf]
    %v181 = vld [vmem:[%s1 + $0x1a4] sm:$0xf]
    %v182 = vld [vmem:[%s1 + $0x1a8] sm:$0xf]
    %v183 = vld [vmem:[%s1 + $0x1ac] sm:$0xf]
    %v184 = vld [vmem:[%s1 + $0x1b0] sm:$0xf]
    %v185 = vld [vmem:[%s1 + $0x1b4] sm:$0xf]
    %v186 = vld [vmem:[%s1 + $0x1b8] sm:$0xf]
    %v187 = vld [vmem:[%s1 + $0x1bc] sm:$0xf]
    %v188 = vld [vmem:[%s1 + $0x1c0] sm:$0xf]
    %v189 = vld [vmem:[%s1 + $0x1c4] sm:$0xf]
    %v190 = vld [vmem:[%s1 + $0x1c8] sm:$0xf]
    %v191 = vld [vmem:[%s1 + $0x1cc] sm:$0xf]
    %v192 = vld [vmem:[%s1 + $0x1d0] sm:$0xf]
    %v193 = vld [vmem:[%s1 + $0x1d4] sm:$0xf]
    %v194 = vld [vmem:[%s1 + $0x1d8] sm:$0xf]
    %v195 = vld [vmem:[%s1 + $0x1dc] sm:$0xf]
    %v196 = vld [vmem:[%s1 + $0x1e0] sm:$0xf]
    %v197 = vld [vmem:[%s1 + $0x1e4] sm:$0xf]
    %v198 = vld [vmem:[%s1 + $0x1e8] sm:$0xf]
    %v199 = vld [vmem:[%s1 + $0x1ec] sm:$0xf]
    %v200 = vld [vmem:[%s1 + $0x1f0] sm:$0xf]
    %v201 = vld [vmem:[%s1 + $0x1f4] sm:$0xf]
    %v202 = vld [vmem:[%s1 + $0x1f8] sm:$0xf]
    %v203 = vld [vmem:[%s1 + $0x1fc] sm:$0xf]
    %v204 = vld [vmem:[%s2] sm:$0x1]
    %v206 = vlaneseq
    %v207 = vshrl.u32 %v206, 7
    %v208 = vsub.s32 0, %v207
    %v209 = vrot.slane %v204, %v208
    %v339 = vunpack.c.l.b16 %v76
    %v340 = vunpack.c.l.b16 %v77
    %v341 = vunpack.c.l.b16 %v78
    %v342 = vunpack.c.l.b16 %v79
    %v343 = vunpack.c.l.b16 %v80
    %v344 = vunpack.c.l.b16 %v81
    %v345 = vunpack.c.l.b16 %v82
    %v346 = vunpack.c.l.b16 %v83
    %v347 = vunpack.c.l.b16 %v84
    %v348 = vunpack.c.l.b16 %v85
    %v349 = vunpack.c.l.b16 %v86
    %v350 = vunpack.c.l.b16 %v87
    %v351 = vunpack.c.l.b16 %v88
    %v352 = vunpack.c.l.b16 %v89
    %v353 = vunpack.c.l.b16 %v90
    %v354 = vunpack.c.l.b16 %v91
    %v355 = vunpack.c.l.b16 %v92
    %v356 = vunpack.c.l.b16 %v93
    %v357 = vunpack.c.l.b16 %v94
    %v358 = vunpack.c.l.b16 %v95
    %v359 = vunpack.c.l.b16 %v96
    %v360 = vunpack.c.l.b16 %v97
    %v361 = vunpack.c.l.b16 %v98
    %v362 = vunpack.c.l.b16 %v99
    %v363 = vunpack.c.l.b16 %v100
    %v364 = vunpack.c.l.b16 %v101
    %v365 = vunpack.c.l.b16 %v102
    %v366 = vunpack.c.l.b16 %v103
    %v367 = vunpack.c.l.b16 %v104
    %v368 = vunpack.c.l.b16 %v105
    %v369 = vunpack.c.l.b16 %v106
    %v370 = vunpack.c.l.b16 %v107
    %v371 = vunpack.c.l.b16 %v108
    %v372 = vunpack.c.l.b16 %v109
    %v373 = vunpack.c.l.b16 %v110
    %v374 = vunpack.c.l.b16 %v111
    %v375 = vunpack.c.l.b16 %v112
    %v376 = vunpack.c.l.b16 %v113
    %v377 = vunpack.c.l.b16 %v114
    %v378 = vunpack.c.l.b16 %v115
    %v379 = vunpack.c.l.b16 %v116
    %v380 = vunpack.c.l.b16 %v117
    %v381 = vunpack.c.l.b16 %v118
    %v382 = vunpack.c.l.b16 %v119
    %v383 = vunpack.c.l.b16 %v120
    %v384 = vunpack.c.l.b16 %v121
    %v385 = vunpack.c.l.b16 %v122
    %v386 = vunpack.c.l.b16 %v123
    %v387 = vunpack.c.l.b16 %v124
    %v388 = vunpack.c.l.b16 %v125
    %v389 = vunpack.c.l.b16 %v126
    %v390 = vunpack.c.l.b16 %v127
    %v391 = vunpack.c.l.b16 %v128
    %v392 = vunpack.c.l.b16 %v129
    %v393 = vunpack.c.l.b16 %v130
    %v394 = vunpack.c.l.b16 %v131
    %v395 = vunpack.c.l.b16 %v132
    %v396 = vunpack.c.l.b16 %v133
    %v397 = vunpack.c.l.b16 %v134
    %v398 = vunpack.c.l.b16 %v135
    %v399 = vunpack.c.l.b16 %v136
    %v400 = vunpack.c.l.b16 %v137
    %v401 = vunpack.c.l.b16 %v138
    %v402 = vunpack.c.l.b16 %v139
    %v403 = vunpack.c.l.b16 %v140
    %v404 = vunpack.c.l.b16 %v141
    %v405 = vunpack.c.l.b16 %v142
    %v406 = vunpack.c.l.b16 %v143
    %v407 = vunpack.c.l.b16 %v144
    %v408 = vunpack.c.l.b16 %v145
    %v409 = vunpack.c.l.b16 %v146
    %v410 = vunpack.c.l.b16 %v147
    %v411 = vunpack.c.l.b16 %v148
    %v412 = vunpack.c.l.b16 %v149
    %v413 = vunpack.c.l.b16 %v150
    %v414 = vunpack.c.l.b16 %v151
    %v415 = vunpack.c.l.b16 %v152
    %v416 = vunpack.c.l.b16 %v153
    %v417 = vunpack.c.l.b16 %v154
    %v418 = vunpack.c.l.b16 %v155
    %v419 = vunpack.c.l.b16 %v156
    %v420 = vunpack.c.l.b16 %v157
    %v421 = vunpack.c.l.b16 %v158
    %v422 = vunpack.c.l.b16 %v159
    %v423 = vunpack.c.l.b16 %v160
    %v424 = vunpack.c.l.b16 %v161
    %v425 = vunpack.c.l.b16 %v162
    %v426 = vunpack.c.l.b16 %v163
    %v427 = vunpack.c.l.b16 %v164
    %v428 = vunpack.c.l.b16 %v165
    %v429 = vunpack.c.l.b16 %v166
    %v430 = vunpack.c.l.b16 %v167
    %v431 = vunpack.c.l.b16 %v168
    %v432 = vunpack.c.l.b16 %v169
    %v433 = vunpack.c.l.b16 %v170
    %v434 = vunpack.c.l.b16 %v171
    %v435 = vunpack.c.l.b16 %v172
    %v436 = vunpack.c.l.b16 %v173
    %v437 = vunpack.c.l.b16 %v174
    %v438 = vunpack.c.l.b16 %v175
    %v439 = vunpack.c.l.b16 %v176
    %v440 = vunpack.c.l.b16 %v177
    %v441 = vunpack.c.l.b16 %v178
    %v442 = vunpack.c.l.b16 %v179
    %v443 = vunpack.c.l.b16 %v180
    %v444 = vunpack.c.l.b16 %v181
    %v445 = vunpack.c.l.b16 %v182
    %v446 = vunpack.c.l.b16 %v183
    %v447 = vunpack.c.l.b16 %v184
    %v448 = vunpack.c.l.b16 %v185
    %v449 = vunpack.c.l.b16 %v186
    %v450 = vunpack.c.l.b16 %v187
    %v451 = vunpack.c.l.b16 %v188
    %v452 = vunpack.c.l.b16 %v189
    %v453 = vunpack.c.l.b16 %v190
    %v454 = vunpack.c.l.b16 %v191
    %v455 = vunpack.c.l.b16 %v192
    %v456 = vunpack.c.l.b16 %v193
    %v457 = vunpack.c.l.b16 %v194
    %v458 = vunpack.c.l.b16 %v195
    %v459 = vunpack.c.l.b16 %v196
    %v460 = vunpack.c.l.b16 %v197
    %v461 = vunpack.c.l.b16 %v198
    %v462 = vunpack.c.l.b16 %v199
    %v463 = vunpack.c.l.b16 %v200
    %v464 = vunpack.c.l.b16 %v201
    %v465 = vunpack.c.l.b16 %v202
    %v466 = vunpack.c.l.b16 %v203
    %v467 = vpack.c.b16 %v340, %v339
    %v468 = vpack.c.b16 %v342, %v341
    %v469 = vpack.c.b16 %v344, %v343
    %v470 = vpack.c.b16 %v346, %v345
    %v471 = vpack.c.b16 %v348, %v347
    %v472 = vpack.c.b16 %v350, %v349
    %v473 = vpack.c.b16 %v352, %v351
    %v474 = vpack.c.b16 %v354, %v353
    %v475 = vpack.c.b16 %v356, %v355
    %v476 = vpack.c.b16 %v358, %v357
    %v477 = vpack.c.b16 %v360, %v359
    %v478 = vpack.c.b16 %v362, %v361
    %v479 = vpack.c.b16 %v364, %v363
    %v480 = vpack.c.b16 %v366, %v365
    %v481 = vpack.c.b16 %v368, %v367
    %v482 = vpack.c.b16 %v370, %v369
    %v483 = vpack.c.b16 %v372, %v371
    %v484 = vpack.c.b16 %v374, %v373
    %v485 = vpack.c.b16 %v376, %v375
    %v486 = vpack.c.b16 %v378, %v377
    %v487 = vpack.c.b16 %v380, %v379
    %v488 = vpack.c.b16 %v382, %v381
    %v489 = vpack.c.b16 %v384, %v383
    %v490 = vpack.c.b16 %v386, %v385
    %v491 = vpack.c.b16 %v388, %v387
    %v492 = vpack.c.b16 %v390, %v389
    %v493 = vpack.c.b16 %v392, %v391
    %v494 = vpack.c.b16 %v394, %v393
    %v495 = vpack.c.b16 %v396, %v395
    %v496 = vpack.c.b16 %v398, %v397
    %v497 = vpack.c.b16 %v400, %v399
    %v498 = vpack.c.b16 %v402, %v401
    %v499 = vpack.c.b16 %v404, %v403
    %v500 = vpack.c.b16 %v406, %v405
    %v501 = vpack.c.b16 %v408, %v407
    %v502 = vpack.c.b16 %v410, %v409
    %v503 = vpack.c.b16 %v412, %v411
    %v504 = vpack.c.b16 %v414, %v413
    %v505 = vpack.c.b16 %v416, %v415
    %v506 = vpack.c.b16 %v418, %v417
    %v507 = vpack.c.b16 %v420, %v419
    %v508 = vpack.c.b16 %v422, %v421
    %v509 = vpack.c.b16 %v424, %v423
    %v510 = vpack.c.b16 %v426, %v425
    %v511 = vpack.c.b16 %v428, %v427
    %v512 = vpack.c.b16 %v430, %v429
    %v513 = vpack.c.b16 %v432, %v431
    %v514 = vpack.c.b16 %v434, %v433
    %v515 = vpack.c.b16 %v436, %v435
    %v516 = vpack.c.b16 %v438, %v437
    %v517 = vpack.c.b16 %v440, %v439
    %v518 = vpack.c.b16 %v442, %v441
    %v519 = vpack.c.b16 %v444, %v443
    %v520 = vpack.c.b16 %v446, %v445
    %v521 = vpack.c.b16 %v448, %v447
    %v522 = vpack.c.b16 %v450, %v449
    %v523 = vpack.c.b16 %v452, %v451
    %v524 = vpack.c.b16 %v454, %v453
    %v525 = vpack.c.b16 %v456, %v455
    %v526 = vpack.c.b16 %v458, %v457
    %v527 = vpack.c.b16 %v460, %v459
    %v528 = vpack.c.b16 %v462, %v461
    %v529 = vpack.c.b16 %v464, %v463
    %v530 = vpack.c.b16 %v466, %v465
    %595 = vmatprep.subr.bf16.mxu0 0
    %596 = vmatpush1.bf16.msra.mxu0 %v467
    %597 = vmatprep.subr.bf16.mxu0 0
    %598 = vmatpush1.bf16.msra.mxu0 %v468
    %599 = vmatprep.subr.bf16.mxu0 0
    %600 = vmatpush1.bf16.msra.mxu0 %v469
    %601 = vmatprep.subr.bf16.mxu0 0
    %602 = vmatpush1.bf16.msra.mxu0 %v470
    %603 = vmatprep.subr.bf16.mxu0 0
    %604 = vmatpush1.bf16.msra.mxu0 %v471
    %605 = vmatprep.subr.bf16.mxu0 0
    %606 = vmatpush1.bf16.msra.mxu0 %v472
    %607 = vmatprep.subr.bf16.mxu0 0
    %608 = vmatpush1.bf16.msra.mxu0 %v473
    %609 = vmatprep.subr.bf16.mxu0 0
    %610 = vmatpush1.bf16.msra.mxu0 %v474
    %611 = vmatprep.subr.bf16.mxu0 0
    %612 = vmatpush1.bf16.msra.mxu0 %v475
    %613 = vmatprep.subr.bf16.mxu0 0
    %614 = vmatpush1.bf16.msra.mxu0 %v476
    %615 = vmatprep.subr.bf16.mxu0 0
    %616 = vmatpush1.bf16.msra.mxu0 %v477
    %617 = vmatprep.subr.bf16.mxu0 0
    %618 = vmatpush1.bf16.msra.mxu0 %v478
    %619 = vmatprep.subr.bf16.mxu0 0
    %620 = vmatpush1.bf16.msra.mxu0 %v479
    %621 = vmatprep.subr.bf16.mxu0 0
    %622 = vmatpush1.bf16.msra.mxu0 %v480
    %623 = vmatprep.subr.bf16.mxu0 0
    %624 = vmatpush1.bf16.msra.mxu0 %v481
    %625 = vmatprep.subr.bf16.mxu0 0
    %626 = vmatpush1.bf16.msra.mxu0 %v482
    %627 = vmatprep.mubr.bf16.mxu0 %v69
    %628 = vmatmul.mubr.bf16.gmra.mrb[0].mxu0 %v68
    %v629 = vpop.f32.mrb[0].mxu0
    %v630 = vadd.f32 %v209, %v629
    %v631 = vpop.f32.mrb[0].mxu0
    %v632 = vpop.f32.mrb[0].mxu0
    %v633 = vpop.f32.mrb[0].mxu0
    %634 = vdwg.mxu0
    %635 = vmatprep.subr.bf16.mxu0 0
    %636 = vmatpush1.bf16.msra.mxu0 %v483
    %637 = vmatprep.subr.bf16.mxu0 0
    %638 = vmatpush1.bf16.msra.mxu0 %v484
    %639 = vmatprep.subr.bf16.mxu0 0
    %640 = vmatpush1.bf16.msra.mxu0 %v485
    %641 = vmatprep.subr.bf16.mxu0 0
    %642 = vmatpush1.bf16.msra.mxu0 %v486
    %643 = vmatprep.subr.bf16.mxu0 0
    %644 = vmatpush1.bf16.msra.mxu0 %v487
    %645 = vmatprep.subr.bf16.mxu0 0
    %646 = vmatpush1.bf16.msra.mxu0 %v488
    %647 = vmatprep.subr.bf16.mxu0 0
    %648 = vmatpush1.bf16.msra.mxu0 %v489
    %649 = vmatprep.subr.bf16.mxu0 0
    %650 = vmatpush1.bf16.msra.mxu0 %v490
    %651 = vmatprep.subr.bf16.mxu0 0
    %652 = vmatpush1.bf16.msra.mxu0 %v491
    %653 = vmatprep.subr.bf16.mxu0 0
    %654 = vmatpush1.bf16.msra.mxu0 %v492
    %655 = vmatprep.subr.bf16.mxu0 0
    %656 = vmatpush1.bf16.msra.mxu0 %v493
    %657 = vmatprep.subr.bf16.mxu0 0
    %658 = vmatpush1.bf16.msra.mxu0 %v494
    %659 = vmatprep.subr.bf16.mxu0 0
    %660 = vmatpush1.bf16.msra.mxu0 %v495
    %661 = vmatprep.subr.bf16.mxu0 0
    %662 = vmatpush1.bf16.msra.mxu0 %v496
    %663 = vmatprep.subr.bf16.mxu0 0
    %664 = vmatpush1.bf16.msra.mxu0 %v497
    %665 = vmatprep.subr.bf16.mxu0 0
    %666 = vmatpush1.bf16.msra.mxu0 %v498
    %667 = vmatprep.mubr.bf16.mxu0 %v71
    %668 = vmatmul.mubr.bf16.gmra.mrb[0].mxu0 %v70
    %v669 = vpop.f32.mrb[0].mxu0
    %v670 = vadd.f32 %v630, %v669
    %v671 = vpop.f32.mrb[0].mxu0
    %v672 = vpop.f32.mrb[0].mxu0
    %v673 = vpop.f32.mrb[0].mxu0
    %674 = vdwg.mxu0
    %675 = vmatprep.subr.bf16.mxu0 0
    %676 = vmatpush1.bf16.msra.mxu0 %v499
    %677 = vmatprep.subr.bf16.mxu0 0
    %678 = vmatpush1.bf16.msra.mxu0 %v500
    %679 = vmatprep.subr.bf16.mxu0 0
    %680 = vmatpush1.bf16.msra.mxu0 %v501
    %681 = vmatprep.subr.bf16.mxu0 0
    %682 = vmatpush1.bf16.msra.mxu0 %v502
    %683 = vmatprep.subr.bf16.mxu0 0
    %684 = vmatpush1.bf16.msra.mxu0 %v503
    %685 = vmatprep.subr.bf16.mxu0 0
    %686 = vmatpush1.bf16.msra.mxu0 %v504
    %687 = vmatprep.subr.bf16.mxu0 0
    %688 = vmatpush1.bf16.msra.mxu0 %v505
    %689 = vmatprep.subr.bf16.mxu0 0
    %690 = vmatpush1.bf16.msra.mxu0 %v506
    %691 = vmatprep.subr.bf16.mxu0 0
    %692 = vmatpush1.bf16.msra.mxu0 %v507
    %693 = vmatprep.subr.bf16.mxu0 0
    %694 = vmatpush1.bf16.msra.mxu0 %v508
    %695 = vmatprep.subr.bf16.mxu0 0
    %696 = vmatpush1.bf16.msra.mxu0 %v509
    %697 = vmatprep.subr.bf16.mxu0 0
    %698 = vmatpush1.bf16.msra.mxu0 %v510
    %699 = vmatprep.subr.bf16.mxu0 0
    %700 = vmatpush1.bf16.msra.mxu0 %v511
    %701 = vmatprep.subr.bf16.mxu0 0
    %702 = vmatpush1.bf16.msra.mxu0 %v512
    %703 = vmatprep.subr.bf16.mxu0 0
    %704 = vmatpush1.bf16.msra.mxu0 %v513
    %705 = vmatprep.subr.bf16.mxu0 0
    %706 = vmatpush1.bf16.msra.mxu0 %v514
    %707 = vmatprep.mubr.bf16.mxu0 %v73
    %708 = vmatmul.mubr.bf16.gmra.mrb[0].mxu0 %v72
    %v709 = vpop.f32.mrb[0].mxu0
    %v710 = vadd.f32 %v670, %v709
    %v711 = vpop.f32.mrb[0].mxu0
    %v712 = vpop.f32.mrb[0].mxu0
    %v713 = vpop.f32.mrb[0].mxu0
    %714 = vdwg.mxu0
    %715 = vmatprep.subr.bf16.mxu0 0
    %716 = vmatpush1.bf16.msra.mxu0 %v515
    %717 = vmatprep.subr.bf16.mxu0 0
    %718 = vmatpush1.bf16.msra.mxu0 %v516
    %719 = vmatprep.subr.bf16.mxu0 0
    %720 = vmatpush1.bf16.msra.mxu0 %v517
    %721 = vmatprep.subr.bf16.mxu0 0
    %722 = vmatpush1.bf16.msra.mxu0 %v518
    %723 = vmatprep.subr.bf16.mxu0 0
    %724 = vmatpush1.bf16.msra.mxu0 %v519
    %725 = vmatprep.subr.bf16.mxu0 0
    %726 = vmatpush1.bf16.msra.mxu0 %v520
    %727 = vmatprep.subr.bf16.mxu0 0
    %728 = vmatpush1.bf16.msra.mxu0 %v521
    %729 = vmatprep.subr.bf16.mxu0 0
    %730 = vmatpush1.bf16.msra.mxu0 %v522
    %731 = vmatprep.subr.bf16.mxu0 0
    %732 = vmatpush1.bf16.msra.mxu0 %v523
    %733 = vmatprep.subr.bf16.mxu0 0
    %734 = vmatpush1.bf16.msra.mxu0 %v524
    %735 = vmatprep.subr.bf16.mxu0 0
    %736 = vmatpush1.bf16.msra.mxu0 %v525
    %737 = vmatprep.subr.bf16.mxu0 0
    %738 = vmatpush1.bf16.msra.mxu0 %v526
    %739 = vmatprep.subr.bf16.mxu0 0
    %740 = vmatpush1.bf16.msra.mxu0 %v527
    %741 = vmatprep.subr.bf16.mxu0 0
    %742 = vmatpush1.bf16.msra.mxu0 %v528
    %743 = vmatprep.subr.bf16.mxu0 0
    %744 = vmatpush1.bf16.msra.mxu0 %v529
    %745 = vmatprep.subr.bf16.mxu0 0
    %746 = vmatpush1.bf16.msra.mxu0 %v530
    %747 = vmatprep.mubr.bf16.mxu0 %v75
    %748 = vmatmul.mubr.bf16.gmra.mrb[0].mxu0 %v74
    %v749 = vpop.f32.mrb[0].mxu0
    %v750 = vadd.f32 %v710, %v749
    %v751 = vpop.f32.mrb[0].mxu0
    %v752 = vpop.f32.mrb[0].mxu0
    %v753 = vpop.f32.mrb[0].mxu0
    %754 = vdwg.mxu0
    %v755 = vpack.c.bf16 %v750, %v750
    %v756 = vld [vmem:[%s3] sm:$0xff]
    %v757 = vld [vmem:[%s3 + $0x8] sm:$0xff]
    %v758 = vld [vmem:[%s3 + $0x10] sm:$0xff]
    %v759 = vld [vmem:[%s3 + $0x18] sm:$0xff]
    %v760 = vld [vmem:[%s3 + $0x20] sm:$0xff]
    %v761 = vld [vmem:[%s3 + $0x28] sm:$0xff]
    %v762 = vld [vmem:[%s3 + $0x30] sm:$0xff]
    %v763 = vld [vmem:[%s3 + $0x38] sm:$0xff]
    %v764 = vld [vmem:[%s3 + $0x40] sm:$0xff]
    %v765 = vld [vmem:[%s3 + $0x48] sm:$0xff]
    %v766 = vld [vmem:[%s3 + $0x50] sm:$0xff]
    %v767 = vld [vmem:[%s3 + $0x58] sm:$0xff]
    %v768 = vld [vmem:[%s3 + $0x60] sm:$0xff]
    %v769 = vld [vmem:[%s3 + $0x68] sm:$0xff]
    %v770 = vld [vmem:[%s3 + $0x70] sm:$0xff]
    %v771 = vld [vmem:[%s3 + $0x78] sm:$0xff]
    %v772 = vld [vmem:[%s4] sm:$0xff]
    %v774 = vlaneseq
    %v775 = vshrl.u32 %v774, 7
    %v776 = vsub.s32 0, %v775
    %v777 = vrot.slane %v772, %v776
    %v778 = vlaneseq
    %v779 = vshrl.u32 %v778, 7
    %v780 = vsub.s32 1, %v779
    %v781 = vrot.slane %v772, %v780
    %v782 = vlaneseq
    %v783 = vshrl.u32 %v782, 7
    %v784 = vsub.s32 2, %v783
    %v785 = vrot.slane %v772, %v784
    %v786 = vlaneseq
    %v787 = vshrl.u32 %v786, 7
    %v788 = vsub.s32 3, %v787
    %v789 = vrot.slane %v772, %v788
    %v790 = vlaneseq
    %v791 = vshrl.u32 %v790, 7
    %v792 = vsub.s32 4, %v791
    %v793 = vrot.slane %v772, %v792
    %v794 = vlaneseq
    %v795 = vshrl.u32 %v794, 7
    %v796 = vsub.s32 5, %v795
    %v797 = vrot.slane %v772, %v796
    %v798 = vlaneseq
    %v799 = vshrl.u32 %v798, 7
    %v800 = vsub.s32 6, %v799
    %v801 = vrot.slane %v772, %v800
    %v802 = vlaneseq
    %v803 = vshrl.u32 %v802, 7
    %v804 = vsub.s32 7, %v803
    %v805 = vrot.slane %v772, %v804
    %v830 = vunpack.c.l.b16 %v756
    %v831 = vunpack.c.h.b16 %v756
    %v832 = vunpack.c.l.b16 %v757
    %v833 = vunpack.c.h.b16 %v757
    %v834 = vunpack.c.l.b16 %v758
    %v835 = vunpack.c.h.b16 %v758
    %v836 = vunpack.c.l.b16 %v759
    %v837 = vunpack.c.h.b16 %v759
    %v838 = vunpack.c.l.b16 %v760
    %v839 = vunpack.c.h.b16 %v760
    %v840 = vunpack.c.l.b16 %v761
    %v841 = vunpack.c.h.b16 %v761
    %v842 = vunpack.c.l.b16 %v762
    %v843 = vunpack.c.h.b16 %v762
    %v844 = vunpack.c.l.b16 %v763
    %v845 = vunpack.c.h.b16 %v763
    %v846 = vunpack.c.l.b16 %v764
    %v847 = vunpack.c.h.b16 %v764
    %v848 = vunpack.c.l.b16 %v765
    %v849 = vunpack.c.h.b16 %v765
    %v850 = vunpack.c.l.b16 %v766
    %v851 = vunpack.c.h.b16 %v766
    %v852 = vunpack.c.l.b16 %v767
    %v853 = vunpack.c.h.b16 %v767
    %v854 = vunpack.c.l.b16 %v768
    %v855 = vunpack.c.h.b16 %v768
    %v856 = vunpack.c.l.b16 %v769
    %v857 = vunpack.c.h.b16 %v769
    %v858 = vunpack.c.l.b16 %v770
    %v859 = vunpack.c.h.b16 %v770
    %v860 = vunpack.c.l.b16 %v771
    %v861 = vunpack.c.h.b16 %v771
    %v862 = vpack.c.b16 %v838, %v830
    %v863 = vpack.c.b16 %v839, %v831
    %v864 = vpack.c.b16 %v840, %v832
    %v865 = vpack.c.b16 %v841, %v833
    %v866 = vpack.c.b16 %v842, %v834
    %v867 = vpack.c.b16 %v843, %v835
    %v868 = vpack.c.b16 %v844, %v836
    %v869 = vpack.c.b16 %v845, %v837
    %v870 = vpack.c.b16 %v854, %v846
    %v871 = vpack.c.b16 %v855, %v847
    %v872 = vpack.c.b16 %v856, %v848
    %v873 = vpack.c.b16 %v857, %v849
    %v874 = vpack.c.b16 %v858, %v850
    %v875 = vpack.c.b16 %v859, %v851
    %v876 = vpack.c.b16 %v860, %v852
    %v877 = vpack.c.b16 %v861, %v853
    %vm894 = vcmask 261120
    %v896 = vsel %vm894, %v755, 0
    %898 = vmatprep.subr.bf16.mxu0 %v863
    %899 = vmatpush1.bf16.msra.mxu0 %v862
    %900 = vmatprep.subr.bf16.mxu0 %v871
    %901 = vmatpush1.bf16.msra.mxu0 %v870
    %902 = vmatprep.subr.bf16.mxu0 0
    %903 = vmatpush1.bf16.msra.mxu0 0
    %904 = vmatprep.subr.bf16.mxu0 0
    %905 = vmatpush1.bf16.msra.mxu0 0
    %906 = vmatprep.subr.bf16.mxu0 0
    %907 = vmatpush1.bf16.msra.mxu0 0
    %908 = vmatprep.subr.bf16.mxu0 0
    %909 = vmatpush1.bf16.msra.mxu0 0
    %910 = vmatprep.subr.bf16.mxu0 0
    %911 = vmatpush1.bf16.msra.mxu0 0
    %912 = vmatprep.subr.bf16.mxu0 0
    %913 = vmatpush1.bf16.msra.mxu0 0
    %914 = vmatprep.subr.bf16.mxu0 0
    %915 = vmatpush1.bf16.msra.mxu0 0
    %916 = vmatprep.subr.bf16.mxu0 0
    %917 = vmatpush1.bf16.msra.mxu0 0
    %918 = vmatprep.subr.bf16.mxu0 0
    %919 = vmatpush1.bf16.msra.mxu0 0
    %920 = vmatprep.subr.bf16.mxu0 0
    %921 = vmatpush1.bf16.msra.mxu0 0
    %922 = vmatprep.subr.bf16.mxu0 0
    %923 = vmatpush1.bf16.msra.mxu0 0
    %924 = vmatprep.subr.bf16.mxu0 0
    %925 = vmatpush1.bf16.msra.mxu0 0
    %926 = vmatprep.subr.bf16.mxu0 0
    %927 = vmatpush1.bf16.msra.mxu0 0
    %928 = vmatprep.subr.bf16.mxu0 0
    %929 = vmatpush1.bf16.msra.mxu0 0
    %930 = vmatprep.mubr.bf16.mxu0 0
    %931 = vmatmul.mubr.bf16.gmra.mrb[0].mxu0 %v896
    %v932 = vpop.f32.mrb[0].mxu0
    %v933 = vadd.f32 %v777, %v932
    %v934 = vpop.f32.mrb[0].mxu0
    %v935 = vadd.f32 %v781, %v934
    %v936 = vpop.f32.mrb[0].mxu0
    %v937 = vpop.f32.mrb[0].mxu0
    %938 = vdwg.mxu0
    %939 = vmatprep.subr.bf16.mxu0 %v865
    %940 = vmatpush1.bf16.msra.mxu0 %v864
    %941 = vmatprep.subr.bf16.mxu0 %v873
    %942 = vmatpush1.bf16.msra.mxu0 %v872
    %943 = vmatprep.subr.bf16.mxu0 0
    %944 = vmatpush1.bf16.msra.mxu0 0
    %945 = vmatprep.subr.bf16.mxu0 0
    %946 = vmatpush1.bf16.msra.mxu0 0
    %947 = vmatprep.subr.bf16.mxu0 0
    %948 = vmatpush1.bf16.msra.mxu0 0
    %949 = vmatprep.subr.bf16.mxu0 0
    %950 = vmatpush1.bf16.msra.mxu0 0
    %951 = vmatprep.subr.bf16.mxu0 0
    %952 = vmatpush1.bf16.msra.mxu0 0
    %953 = vmatprep.subr.bf16.mxu0 0
    %954 = vmatpush1.bf16.msra.mxu0 0
    %955 = vmatprep.subr.bf16.mxu0 0
    %956 = vmatpush1.bf16.msra.mxu0 0
    %957 = vmatprep.subr.bf16.mxu0 0
    %958 = vmatpush1.bf16.msra.mxu0 0
    %959 = vmatprep.subr.bf16.mxu0 0
    %960 = vmatpush1.bf16.msra.mxu0 0
    %961 = vmatprep.subr.bf16.mxu0 0
    %962 = vmatpush1.bf16.msra.mxu0 0
    %963 = vmatprep.subr.bf16.mxu0 0
    %964 = vmatpush1.bf16.msra.mxu0 0
    %965 = vmatprep.subr.bf16.mxu0 0
    %966 = vmatpush1.bf16.msra.mxu0 0
    %967 = vmatprep.subr.bf16.mxu0 0
    %968 = vmatpush1.bf16.msra.mxu0 0
    %969 = vmatprep.subr.bf16.mxu0 0
    %970 = vmatpush1.bf16.msra.mxu0 0
    %971 = vmatprep.mubr.bf16.mxu0 0
    %972 = vmatmul.mubr.bf16.gmra.mrb[0].mxu0 %v896
    %v973 = vpop.f32.mrb[0].mxu0
    %v974 = vadd.f32 %v785, %v973
    %v975 = vpop.f32.mrb[0].mxu0
    %v976 = vadd.f32 %v789, %v975
    %v977 = vpop.f32.mrb[0].mxu0
    %v978 = vpop.f32.mrb[0].mxu0
    %979 = vdwg.mxu0
    %980 = vmatprep.subr.bf16.mxu0 %v867
    %981 = vmatpush1.bf16.msra.mxu0 %v866
    %982 = vmatprep.subr.bf16.mxu0 %v875
    %983 = vmatpush1.bf16.msra.mxu0 %v874
    %984 = vmatprep.subr.bf16.mxu0 0
    %985 = vmatpush1.bf16.msra.mxu0 0
    %986 = vmatprep.subr.bf16.mxu0 0
    %987 = vmatpush1.bf16.msra.mxu0 0
    %988 = vmatprep.subr.bf16.mxu0 0
    %989 = vmatpush1.bf16.msra.mxu0 0
    %990 = vmatprep.subr.bf16.mxu0 0
    %991 = vmatpush1.bf16.msra.mxu0 0
    %992 = vmatprep.subr.bf16.mxu0 0
    %993 = vmatpush1.bf16.msra.mxu0 0
    %994 = vmatprep.subr.bf16.mxu0 0
    %995 = vmatpush1.bf16.msra.mxu0 0
    %996 = vmatprep.subr.bf16.mxu0 0
    %997 = vmatpush1.bf16.msra.mxu0 0
    %998 = vmatprep.subr.bf16.mxu0 0
    %999 = vmatpush1.bf16.msra.mxu0 0
    %1000 = vmatprep.subr.bf16.mxu0 0
    %1001 = vmatpush1.bf16.msra.mxu0 0
    %1002 = vmatprep.subr.bf16.mxu0 0
    %1003 = vmatpush1.bf16.msra.mxu0 0
    %1004 = vmatprep.subr.bf16.mxu0 0
    %1005 = vmatpush1.bf16.msra.mxu0 0
    %1006 = vmatprep.subr.bf16.mxu0 0
    %1007 = vmatpush1.bf16.msra.mxu0 0
    %1008 = vmatprep.subr.bf16.mxu0 0
    %1009 = vmatpush1.bf16.msra.mxu0 0
    %1010 = vmatprep.subr.bf16.mxu0 0
    %1011 = vmatpush1.bf16.msra.mxu0 0
    %1012 = vmatprep.mubr.bf16.mxu0 0
    %1013 = vmatmul.mubr.bf16.gmra.mrb[0].mxu0 %v896
    %v1014 = vpop.f32.mrb[0].mxu0
    %v1015 = vadd.f32 %v793, %v1014
    %v1016 = vpop.f32.mrb[0].mxu0
    %v1017 = vadd.f32 %v797, %v1016
    %v1018 = vpop.f32.mrb[0].mxu0
    %v1019 = vpop.f32.mrb[0].mxu0
    %1020 = vdwg.mxu0
    %1021 = vmatprep.subr.bf16.mxu0 %v869
    %1022 = vmatpush1.bf16.msra.mxu0 %v868
    %1023 = vmatprep.subr.bf16.mxu0 %v877
    %1024 = vmatpush1.bf16.msra.mxu0 %v876
    %1025 = vmatprep.subr.bf16.mxu0 0
    %1026 = vmatpush1.bf16.msra.mxu0 0
    %1027 = vmatprep.subr.bf16.mxu0 0
    %1028 = vmatpush1.bf16.msra.mxu0 0
    %1029 = vmatprep.subr.bf16.mxu0 0
    %1030 = vmatpush1.bf16.msra.mxu0 0
    %1031 = vmatprep.subr.bf16.mxu0 0
    %1032 = vmatpush1.bf16.msra.mxu0 0
    %1033 = vmatprep.subr.bf16.mxu0 0
    %1034 = vmatpush1.bf16.msra.mxu0 0
    %1035 = vmatprep.subr.bf16.mxu0 0
    %1036 = vmatpush1.bf16.msra.mxu0 0
    %1037 = vmatprep.subr.bf16.mxu0 0
    %1038 = vmatpush1.bf16.msra.mxu0 0
    %1039 = vmatprep.subr.bf16.mxu0 0
    %1040 = vmatpush1.bf16.msra.mxu0 0
    %1041 = vmatprep.subr.bf16.mxu0 0
    %1042 = vmatpush1.bf16.msra.mxu0 0
    %1043 = vmatprep.subr.bf16.mxu0 0
    %1044 = vmatpush1.bf16.msra.mxu0 0
    %1045 = vmatprep.subr.bf16.mxu0 0
    %1046 = vmatpush1.bf16.msra.mxu0 0
    %1047 = vmatprep.subr.bf16.mxu0 0
    %1048 = vmatpush1.bf16.msra.mxu0 0
    %1049 = vmatprep.subr.bf16.mxu0 0
    %1050 = vmatpush1.bf16.msra.mxu0 0
    %1051 = vmatprep.subr.bf16.mxu0 0
    %1052 = vmatpush1.bf16.msra.mxu0 0
    %1053 = vmatprep.mubr.bf16.mxu0 0
    %1054 = vmatmul.mubr.bf16.gmra.mrb[0].mxu0 %v896
    %v1055 = vpop.f32.mrb[0].mxu0
    %v1056 = vadd.f32 %v801, %v1055
    %v1057 = vpop.f32.mrb[0].mxu0
    %v1058 = vadd.f32 %v805, %v1057
    %v1059 = vpop.f32.mrb[0].mxu0
    %v1060 = vpop.f32.mrb[0].mxu0
    %1061 = vdwg.mxu0
    %v1070 = vcombine.low %v933, %v935
    %v1071 = vcombine.low %v974, %v976
    %v1073 = vunpack.c.l.s4 1983009808
    %v1074 = vunpack.c.0.s8 %v1073
    %v1075 = vlaneseq
    %v1076 = vshrl.u32 %v1075, 7
    %v1077 = vsub.s32 %v1074, %v1076
    %v1078 = vrot.slane %v1070, %v1077
    %v1080 = vunpack.c.l.s4 1983009808
    %v1081 = vunpack.c.0.s8 %v1080
    %v1082 = vlaneseq
    %v1083 = vshrl.u32 %v1082, 7
    %v1084 = vsub.s32 %v1081, %v1083
    %v1085 = vrot.slane %v1071, %v1084
    %v1086 = vcombine.low %v1078, %v1085
    %v1087 = vcombine.low %v1015, %v1017
    %v1088 = vcombine.low %v1056, %v1058
    %v1090 = vunpack.c.l.s4 1983009808
    %v1091 = vunpack.c.0.s8 %v1090
    %v1092 = vlaneseq
    %v1093 = vshrl.u32 %v1092, 7
    %v1094 = vsub.s32 %v1091, %v1093
    %v1095 = vrot.slane %v1087, %v1094
    %v1097 = vunpack.c.l.s4 1983009808
    %v1098 = vunpack.c.0.s8 %v1097
    %v1099 = vlaneseq
    %v1100 = vshrl.u32 %v1099, 7
    %v1101 = vsub.s32 %v1098, %v1100
    %v1102 = vrot.slane %v1088, %v1101
    %v1103 = vcombine.low %v1095, %v1102
    %1106 = vst [vmem:[#allocation2] sm:$0xff] %v1086
    %1107 = vst [vmem:[#allocation2 + $0x8] sm:$0xff] %v1103
    // Predicated region
    $region22: #{tpu_custom_call.1} parent=1 // pred_check
      _
    $region23: #{tpu_custom_call.1} parent=1 // pred_check_branch
      %1109 = sbr.rel (0) target = $region25
    $region24: #{tpu_custom_call.1} parent=1 // pred_region
      %s1111 = ssub.s32 256, 256
      %1112 = vsyncadd [#allocation3], %s1111
      %s1114 = sshll.u32 [#allocation2], 4
      %s1115 = int_to_ptr.vmem [resolvable:$true] %s1114
      %1117 = dma.vmem_to_hbm [thread:$0]  %s1115, 256, %s5, [#allocation3]
    $region25: #{tpu_custom_call.1} parent=1 // pred_fallthru
      _
    // Predicated region
    $region26: #{tpu_custom_call.1} parent=1 // pred_check
      _
    $region27: #{tpu_custom_call.1} parent=1 // pred_check_branch
      %1119 = sbr.rel (0) target = $region29
    $region28: #{tpu_custom_call.1} parent=1 // pred_region
      %1120 = dma.done [#allocation3], 256
    $region29: #{tpu_custom_call.1} parent=1 // pred_fallthru
      _
    %1121 = vsyncpa [#allocation3], 1

</llo_original>
